<compile_context>
chip_gen: v7x
topology: tpu7x:2x2x1
jax: 0.10.0
libtpu: 0.0.40
codegen_flags: <defaults>
</compile_context>

<pallas_src>
import functools

import jax
import jax.numpy as jnp
from jax.experimental import pallas as pl
from jax.experimental.pallas import tpu as pltpu


LANE = 128          # lane width / feature padding target
BIAS_ROWS = 8       # bias stored as an 8-row (sublane-aligned) slab; only row 0 is used
MAX_TB = 512        # batch tile size cap (rows per grid step)


def _round_up(x, m):
    return (x + m - 1) // m * m


def _actor_kernel(n_layers, x_ref, w_ref, b_ref, mu_ref):
    """Fused MLP: n_layers of (matmul + bias), tanh between all but the last.

    x_ref : (TB, pad)              activation tile (zero-padded features)
    w_ref : (n_layers, pad, pad)   per-layer weight, [in, out] layout, zero-padded
    b_ref : (n_layers, 8, pad)     per-layer bias in row 0, rows 1..7 are zero padding
    mu_ref: (TB, pad)              lane-dense output tile
    """
    h = x_ref[...]
    for li in range(n_layers):                       # static unroll: layer count is tiny
        w = w_ref[li]                                # (pad, pad) full-tile load
        b = b_ref[li, 0:1, :]                        # (1, pad) broadcast row
        h = jnp.dot(h, w, preferred_element_type=jnp.float32) + b
        if li < n_layers - 1:
            h = jnp.tanh(h)                          # EUP; off the VALU critical slot
    mu_ref[...] = h.astype(mu_ref.dtype)


def _pack_params(params, pad):
    """Pack [(W [in,out], b [1,out]), ...] into (n_layers,pad,pad) W-blob and
    (n_layers,8,pad) bias-blob, zero-padded so padded lanes are inert."""
    n_layers = len(params)
    w_blob = jnp.zeros((n_layers, pad, pad), jnp.float32)
    b_blob = jnp.zeros((n_layers, BIAS_ROWS, pad), jnp.float32)
    for li, (w, b) in enumerate(params):
        w_blob = w_blob.at[li, : w.shape[0], : w.shape[1]].set(w.astype(jnp.float32))
        b_blob = b_blob.at[li, 0, : b.shape[1]].set(b[0].astype(jnp.float32))
    return w_blob, b_blob


def actor_forward(x, params):
    """params: list of (W [in,out], b [1,out]) pairs; last pair is the output layer.

    Returns (mu, std) with std == ones (trainable_std=False)."""
    B, input_dim = x.shape
    n_layers = len(params)
    output_dim = params[-1][0].shape[1]

    # Pad every feature dim to a multiple of 128 (all layers become square pad x pad).
    pad = _round_up(max([input_dim] + [max(w.shape) for w, _ in params]), LANE)

    # Batch tiling: TB rows per grid step (multiple of 8), batch zero-padded to a whole
    # number of tiles.  Cap TB so x/mu double-buffers stay small even with large `pad`.
    vmem_budget = 8 << 20                              # ~8 MiB for the streamed tiles
    tb_cap = max(8, min(MAX_TB, (vmem_budget // (4 * pad * 4)) // 8 * 8))
    tb = min(tb_cap, _round_up(B, 8))
    b_pad = _round_up(B, tb)
    n_tiles = b_pad // tb

    x_p = jnp.zeros((b_pad, pad), jnp.float32).at[:B, :input_dim].set(
        x.astype(jnp.float32))
    w_blob, b_blob = _pack_params(params, pad)

    kernel = functools.partial(_actor_kernel, n_layers)

    cost = pl.CostEstimate(
        flops=2 * b_pad * pad * pad * n_layers,
        transcendentals=b_pad * pad * (n_layers - 1),
        bytes_accessed=(x_p.size + w_blob.size + b_blob.size + b_pad * pad) * 4,
    )

    grid_spec = pltpu.PrefetchScalarGridSpec(
        num_scalar_prefetch=0,
        grid=(n_tiles,),
        in_specs=[
            # activation tile marches down the batch
            pl.BlockSpec((tb, pad), lambda i: (i, 0)),
            # param blobs: constant block index -> DMA'd once, VMEM-resident thereafter
            pl.BlockSpec((n_layers, pad, pad), lambda i: (0, 0, 0)),
            pl.BlockSpec((n_layers, BIAS_ROWS, pad), lambda i: (0, 0, 0)),
        ],
        out_specs=pl.BlockSpec((tb, pad), lambda i: (i, 0)),
    )

    mu_pad = pl.pallas_call(
        kernel,
        out_shape=jax.ShapeDtypeStruct((b_pad, pad), jnp.float32),
        grid_spec=grid_spec,
        compiler_params=pltpu.CompilerParams(
            dimension_semantics=("parallel",)),   # batch axis splits across v7x's 2 TCs
        cost_estimate=cost,
    )(x_p, w_blob, b_blob)

    mu = mu_pad[:B, :output_dim]
    # trainable_std == False -> std = exp(zeros_like(mu)) = ones; constant, built outside
    # the kernel.
    std = jnp.ones_like(mu)
    return mu, std


def _orthogonal(key, shape, dtype=jnp.float32):
    """Deterministic orthogonal init (matches nn.init.orthogonal_ semantics)."""
    rows, cols = shape
    n = max(rows, cols)
    a = jax.random.normal(key, (n, n), dtype=jnp.float32)
    q, r = jnp.linalg.qr(a)
    q = q * jnp.sign(jnp.diag(r))[None, :]     # sign correction -> unique decomposition
    return q[:rows, :cols].astype(dtype)


def make_actor_params(key, layer_num, input_dim, output_dim, hidden_dim):
    """Builds [(W [in,out], b [1,out]), ...]; weights orthogonal, biases zero."""
    layers_unit = [input_dim] + [hidden_dim] * (layer_num - 1)
    params = []
    keys = jax.random.split(key, layer_num)
    for idx in range(len(layers_unit) - 1):
        fan_in, fan_out = layers_unit[idx], layers_unit[idx + 1]
        w_pt = _orthogonal(keys[idx], (fan_out, fan_in))   # PyTorch layout [out, in]
        params.append((w_pt.T, jnp.zeros((1, fan_out), jnp.float32)))
    w_pt = _orthogonal(keys[-1], (output_dim, layers_unit[-1]))
    params.append((w_pt.T, jnp.zeros((1, output_dim), jnp.float32)))
    return params


def actor_reference(x, params):
    """Pure-JAX reference for correctness checking."""
    h = x
    for w, b in params[:-1]:
        h = jnp.tanh(h @ w + b)
    mu = h @ params[-1][0] + params[-1][1]
    std = jnp.exp(jnp.zeros_like(mu))
    return mu, std


if __name__ == "__main__":
    # Small shapes consistent with the module's forward
    layer_num = 3
    batch = 8
    input_dim = 32
    hidden_dim = 32
    output_dim = 8

    key = jax.random.PRNGKey(0)
    k_x, k_p = jax.random.split(key)
    x = jax.random.normal(k_x, (batch, input_dim), dtype=jnp.float32)
    params = make_actor_params(k_p, layer_num, input_dim, output_dim, hidden_dim)

    mu, std = actor_forward(x, params)
    jax.block_until_ready((mu, std))

    mu_ref, std_ref = actor_reference(x, params)
    assert mu.shape == (batch, output_dim) and std.shape == (batch, output_dim)
    assert jnp.allclose(mu, mu_ref, atol=1e-5, rtol=1e-5)
    assert jnp.allclose(std, std_ref, atol=1e-6)

    print("KERNEL_OK")
</pallas_src>

<mosaic_0001>
module attributes {stable_mosaic.version = 11 : i64} {
  func.func @_actor_kernel(%arg0: i32, %arg1: memref<8x128xf32, #tpu.memory_space<vmem>>, %arg2: memref<3x128x128xf32, #tpu.memory_space<vmem>>, %arg3: memref<3x8x128xf32, #tpu.memory_space<vmem>>, %arg4: memref<8x128xf32, #tpu.memory_space<vmem>>) attributes {dimension_semantics = [#tpu.dimension_semantics<parallel>], iteration_bounds = array<i64: 1>, scalar_prefetch = 0 : i64, scratch_operands = 0 : i64, tpu.core_type = #tpu.core_type<tc>, window_params = [{transform_indices = @transform_0, window_bounds = array<i64: 8, 128>}, {pipeline_mode = #tpu.pipeline_mode<synchronous>, transform_indices = @transform_1, window_bounds = array<i64: 3, 128, 128>}, {pipeline_mode = #tpu.pipeline_mode<synchronous>, transform_indices = @transform_2, window_bounds = array<i64: 3, 8, 128>}, {transform_indices = @transform_3, window_bounds = array<i64: 8, 128>}]} {
    %c0 = arith.constant 0 : index
    %c0_0 = arith.constant 0 : index
    %0 = vector.load %arg1[%c0, %c0_0] : memref<8x128xf32, #tpu.memory_space<vmem>>, vector<8x128xf32>
    %c0_1 = arith.constant 0 : index
    %c0_2 = arith.constant 0 : index
    %c0_3 = arith.constant 0 : index
    %1 = vector.load %arg2[%c0_1, %c0_2, %c0_3] : memref<3x128x128xf32, #tpu.memory_space<vmem>>, vector<1x128x128xf32>
    %2 = vector.shape_cast %1 : vector<1x128x128xf32> to vector<128x128xf32>
    %c0_4 = arith.constant 0 : index
    %c0_5 = arith.constant 0 : index
    %c0_6 = arith.constant 0 : index
    %3 = vector.load %arg3[%c0_4, %c0_5, %c0_6] : memref<3x8x128xf32, #tpu.memory_space<vmem>>, vector<1x1x128xf32>
    %4 = vector.shape_cast %3 : vector<1x1x128xf32> to vector<1x128xf32>
    %cst = arith.constant dense<0.000000e+00> : vector<8x128xf32>
    %5 = tpu.matmul %0, %2, %cst {dimension_numbers = #tpu.dot_dimension_numbers<[1], [0], [0], [1], [0, 0, 1, 1], [], []>} : vector<8x128xf32>, vector<128x128xf32>, vector<8x128xf32> -> vector<8x128xf32>
    %6 = vector.broadcast %4 : vector<1x128xf32> to vector<8x128xf32>
    %7 = arith.addf %5, %6 : vector<8x128xf32>
    %8 = math.tanh %7 : vector<8x128xf32>
    %c1 = arith.constant 1 : index
    %c0_7 = arith.constant 0 : index
    %c0_8 = arith.constant 0 : index
    %9 = vector.load %arg2[%c1, %c0_7, %c0_8] : memref<3x128x128xf32, #tpu.memory_space<vmem>>, vector<1x128x128xf32>
    %10 = vector.shape_cast %9 : vector<1x128x128xf32> to vector<128x128xf32>
    %c1_9 = arith.constant 1 : index
    %c0_10 = arith.constant 0 : index
    %c0_11 = arith.constant 0 : index
    %11 = vector.load %arg3[%c1_9, %c0_10, %c0_11] : memref<3x8x128xf32, #tpu.memory_space<vmem>>, vector<1x1x128xf32>
    %12 = vector.shape_cast %11 : vector<1x1x128xf32> to vector<1x128xf32>
    %cst_12 = arith.constant dense<0.000000e+00> : vector<8x128xf32>
    %13 = tpu.matmul %8, %10, %cst_12 {dimension_numbers = #tpu.dot_dimension_numbers<[1], [0], [0], [1], [0, 0, 1, 1], [], []>} : vector<8x128xf32>, vector<128x128xf32>, vector<8x128xf32> -> vector<8x128xf32>
    %14 = vector.broadcast %12 : vector<1x128xf32> to vector<8x128xf32>
    %15 = arith.addf %13, %14 : vector<8x128xf32>
    %16 = math.tanh %15 : vector<8x128xf32>
    %c2 = arith.constant 2 : index
    %c0_13 = arith.constant 0 : index
    %c0_14 = arith.constant 0 : index
    %17 = vector.load %arg2[%c2, %c0_13, %c0_14] : memref<3x128x128xf32, #tpu.memory_space<vmem>>, vector<1x128x128xf32>
    %18 = vector.shape_cast %17 : vector<1x128x128xf32> to vector<128x128xf32>
    %c2_15 = arith.constant 2 : index
    %c0_16 = arith.constant 0 : index
    %c0_17 = arith.constant 0 : index
    %19 = vector.load %arg3[%c2_15, %c0_16, %c0_17] : memref<3x8x128xf32, #tpu.memory_space<vmem>>, vector<1x1x128xf32>
    %20 = vector.shape_cast %19 : vector<1x1x128xf32> to vector<1x128xf32>
    %cst_18 = arith.constant dense<0.000000e+00> : vector<8x128xf32>
    %21 = tpu.matmul %16, %18, %cst_18 {dimension_numbers = #tpu.dot_dimension_numbers<[1], [0], [0], [1], [0, 0, 1, 1], [], []>} : vector<8x128xf32>, vector<128x128xf32>, vector<8x128xf32> -> vector<8x128xf32>
    %22 = vector.broadcast %20 : vector<1x128xf32> to vector<8x128xf32>
    %23 = arith.addf %21, %22 : vector<8x128xf32>
    %c0_19 = arith.constant 0 : index
    %c0_20 = arith.constant 0 : index
    %24 = vector.load %arg4[%c0_19, %c0_20] : memref<8x128xf32, #tpu.memory_space<vmem>>, vector<8x128xf32>
    tpu.vector_store %arg4[%c0_19, %c0_20], %23 {strides = array<i32>} : memref<8x128xf32, #tpu.memory_space<vmem>>, vector<8x128xf32>,
    return
  }
  func.func @transform_0(%arg0: i32) -> (i32, i32) {
    %c0_i32 = arith.constant 0 : i32
    %c0_i32_0 = arith.constant 0 : i32
    return %arg0, %c0_i32 : i32, i32
  }
  func.func @transform_1(%arg0: i32) -> (i32, i32, i32) {
    %c0_i32 = arith.constant 0 : i32
    %c0_i32_0 = arith.constant 0 : i32
    %c0_i32_1 = arith.constant 0 : i32
    %c0_i32_2 = arith.constant 0 : i32
    return %c0_i32, %c0_i32_0, %c0_i32_1 : i32, i32, i32
  }
  func.func @transform_2(%arg0: i32) -> (i32, i32, i32) {
    %c0_i32 = arith.constant 0 : i32
    %c0_i32_0 = arith.constant 0 : i32
    %c0_i32_1 = arith.constant 0 : i32
    %c0_i32_2 = arith.constant 0 : i32
    return %c0_i32, %c0_i32_0, %c0_i32_1 : i32, i32, i32
  }
  func.func @transform_3(%arg0: i32) -> (i32, i32) {
    %c0_i32 = arith.constant 0 : i32
    %c0_i32_0 = arith.constant 0 : i32
    return %arg0, %c0_i32 : i32, i32
  }
}

</mosaic_0001>

<llo_original>
// kernel: tpu_custom_call.1
$region0: #{tpu_custom_call.1}
  #allocation0 [shape = 'u32[]', space=smem, size = 0x4, offset = 0x4, fixed_abs, tag = 'smem constant byte address 0x4 - core index']
  #allocation1 [shape = 'u32[144,128]{1,0:T(1,128)}', space=vmem, size = 0x12000, scoped, tag = 'internal scratch']
  %s0 = inlined_call_operand.hbm [shape: f32[8,128], index: 0, kind: input, shape index: {}]
  %s1 = inlined_call_operand.hbm [shape: f32[3,128,128], index: 1, kind: input, shape index: {}]
  %s2 = inlined_call_operand.hbm [shape: f32[3,8,128], index: 2, kind: input, shape index: {}]
  %s3 = inlined_call_operand.hbm [shape: f32[8,128], index: 3, kind: output, shape index: {}]
  %s4 = sld [smem:[#allocation0]]
  $region34: #{tpu_custom_call.1} parent=0
    _
  %s6 = ssub.s32 1, %s4
  %s7 = scalar_select 0, %s6, %s4
  $region1: #{tpu_custom_call.1} parent=0
    #allocation2 [shape = 'u8[4096]{0}', space=vmem, size = 0x1000, scoped, tag = 'input window, operand 0, single buffered']
    #allocation3 [shape = 's32[1]{0}', space=sflag, size = 0x4, scoped, tag = 'scoped memory for tpu_custom_call.1']
    #allocation4 [shape = 's32[1]{0}', space=sflag, size = 0x4, scoped, tag = 'scoped memory for tpu_custom_call.1']
    #allocation5 [shape = 'u8[196608]{0}', space=vmem, size = 0x30000, scoped, tag = 'input window, operand 1, single buffered']
    #allocation6 [shape = 's32[1]{0}', space=sflag, size = 0x4, scoped, tag = 'scoped memory for tpu_custom_call.1']
    #allocation7 [shape = 'u8[12288]{0}', space=vmem, size = 0x3000, scoped, tag = 'input window, operand 2, single buffered']
    #allocation8 [shape = 'u8[4096]{0}', space=vmem, size = 0x1000, scoped, tag = 'output window, operand 0, single buffered']
    %8 = vsyncpa [#allocation3], 0
    %9 = vsyncpa [#allocation6], 0
    %10 = vsyncpa [#allocation4], 0
    // Predicated region
    $region2: #{tpu_custom_call.1} parent=1 // pred_check
      _
    $region3: #{tpu_custom_call.1} parent=1 // pred_check_branch
      %12 = sbr.rel (0) target = $region5
    $region4: #{tpu_custom_call.1} parent=1 // pred_region
      %s14 = ssub.s32 128, 128
      %15 = vsyncadd [#allocation3], %s14
      %s17 = sshll.u32 [#allocation2], 4
      %s18 = int_to_ptr.vmem [resolvable:$true] %s17
      %20 = dma.hbm_to_vmem [thread:$0]  %s0, 128, %s18, [#allocation3]
    $region5: #{tpu_custom_call.1} parent=1 // pred_fallthru
      _
    // Predicated region
    $region6: #{tpu_custom_call.1} parent=1 // pred_check
      _
    $region7: #{tpu_custom_call.1} parent=1 // pred_check_branch
      %22 = sbr.rel (0) target = $region9
    $region8: #{tpu_custom_call.1} parent=1 // pred_region
      %s24 = ssub.s32 6144, 6144
      %25 = vsyncadd [#allocation6], %s24
      %s26 = sshll.u32 [#allocation5], 4
      %s27 = int_to_ptr.vmem [resolvable:$true] %s26
      %32 = dma.hbm_to_vmem [thread:$0]  %s1, 6144, %s27, [#allocation6], 128, 128, 8
    $region9: #{tpu_custom_call.1} parent=1 // pred_fallthru
      _
    // Predicated region
    $region10: #{tpu_custom_call.1} parent=1 // pred_check
      _
    $region11: #{tpu_custom_call.1} parent=1 // pred_check_branch
      %34 = sbr.rel (0) target = $region13
    $region12: #{tpu_custom_call.1} parent=1 // pred_region
      %s36 = ssub.s32 384, 384
      %37 = vsyncadd [#allocation6], %s36
      %s38 = sshll.u32 [#allocation7], 4
      %s39 = int_to_ptr.vmem [resolvable:$true] %s38
      %44 = dma.hbm_to_vmem [thread:$0]  %s2, 384, %s39, [#allocation6], 128, 128, 8
    $region13: #{tpu_custom_call.1} parent=1 // pred_fallthru
      _
    // Predicated region
    $region14: #{tpu_custom_call.1} parent=1 // pred_check
      _
    $region15: #{tpu_custom_call.1} parent=1 // pred_check_branch
      %46 = sbr.rel (0) target = $region17
    $region16: #{tpu_custom_call.1} parent=1 // pred_region
      %47 = dma.done [#allocation3], 128
    $region17: #{tpu_custom_call.1} parent=1 // pred_fallthru
      _
    // Predicated region
    $region18: #{tpu_custom_call.1} parent=1 // pred_check
      _
    $region19: #{tpu_custom_call.1} parent=1 // pred_check_branch
      %49 = sbr.rel (0) target = $region21
    $region20: #{tpu_custom_call.1} parent=1 // pred_region
      %50 = dma.done [#allocation6], 6144
    $region21: #{tpu_custom_call.1} parent=1 // pred_fallthru
      _
    // Predicated region
    $region22: #{tpu_custom_call.1} parent=1 // pred_check
      _
    $region23: #{tpu_custom_call.1} parent=1 // pred_check_branch
      %52 = sbr.rel (0) target = $region25
    $region24: #{tpu_custom_call.1} parent=1 // pred_region
      %53 = dma.done [#allocation6], 384
    $region25: #{tpu_custom_call.1} parent=1 // pred_fallthru
      _
    %v54 = vld [vmem:[#allocation2] sm:$0xff]
    %v55 = vld [vmem:[#allocation5] sm:$0xff]
    %v56 = vld [vmem:[#allocation5 + $0x8] sm:$0xff]
    %v57 = vld [vmem:[#allocation5 + $0x10] sm:$0xff]
    %v58 = vld [vmem:[#allocation5 + $0x18] sm:$0xff]
    %v59 = vld [vmem:[#allocation5 + $0x20] sm:$0xff]
    %v60 = vld [vmem:[#allocation5 + $0x28] sm:$0xff]
    %v61 = vld [vmem:[#allocation5 + $0x30] sm:$0xff]
    %v62 = vld [vmem:[#allocation5 + $0x38] sm:$0xff]
    %v63 = vld [vmem:[#allocation5 + $0x40] sm:$0xff]
    %v64 = vld [vmem:[#allocation5 + $0x48] sm:$0xff]
    %v65 = vld [vmem:[#allocation5 + $0x50] sm:$0xff]
    %v66 = vld [vmem:[#allocation5 + $0x58] sm:$0xff]
    %v67 = vld [vmem:[#allocation5 + $0x60] sm:$0xff]
    %v68 = vld [vmem:[#allocation5 + $0x68] sm:$0xff]
    %v69 = vld [vmem:[#allocation5 + $0x70] sm:$0xff]
    %v70 = vld [vmem:[#allocation5 + $0x78] sm:$0xff]
    %v71 = vld [vmem:[#allocation7] sm:$0x1]
    %v72 = vlaneseq
    %v73 = vshrl.u32 %v72, 7
    %v74 = vsub.s32 0, %v73
    %v75 = vrot.slane %v71, %v74
    %76 = vmatprep.subr.mxu0 0.0
    %77 = vmatpush1.msra.mxu0 %v55
    %78 = vmatprep.subr.mxu0 0.0
    %79 = vmatpush1.msra.mxu0 %v56
    %80 = vmatprep.subr.mxu0 0.0
    %81 = vmatpush1.msra.mxu0 %v57
    %82 = vmatprep.subr.mxu0 0.0
    %83 = vmatpush1.msra.mxu0 %v58
    %84 = vmatprep.subr.mxu0 0.0
    %85 = vmatpush1.msra.mxu0 %v59
    %86 = vmatprep.subr.mxu0 0.0
    %87 = vmatpush1.msra.mxu0 %v60
    %88 = vmatprep.subr.mxu0 0.0
    %89 = vmatpush1.msra.mxu0 %v61
    %90 = vmatprep.subr.mxu0 0.0
    %91 = vmatpush1.msra.mxu0 %v62
    %92 = vmatprep.subr.mxu0 0.0
    %93 = vmatpush1.msra.mxu0 %v63
    %94 = vmatprep.subr.mxu0 0.0
    %95 = vmatpush1.msra.mxu0 %v64
    %96 = vmatprep.subr.mxu0 0.0
    %97 = vmatpush1.msra.mxu0 %v65
    %98 = vmatprep.subr.mxu0 0.0
    %99 = vmatpush1.msra.mxu0 %v66
    %100 = vmatprep.subr.mxu0 0.0
    %101 = vmatpush1.msra.mxu0 %v67
    %102 = vmatprep.subr.mxu0 0.0
    %103 = vmatpush1.msra.mxu0 %v68
    %104 = vmatprep.subr.mxu0 0.0
    %105 = vmatpush1.msra.mxu0 %v69
    %106 = vmatprep.subr.mxu0 0.0
    %107 = vmatpush1.msra.mxu0 %v70
    %108 = vmatprep.subr.mxu0 0.0
    %109 = vmatpush1.msra.mxu0 0.0
    %110 = vmatprep.subr.mxu0 0.0
    %111 = vmatpush1.msra.mxu0 0.0
    %112 = vmatprep.subr.mxu0 0.0
    %113 = vmatpush1.msra.mxu0 0.0
    %114 = vmatprep.subr.mxu0 0.0
    %115 = vmatpush1.msra.mxu0 0.0
    %116 = vmatprep.subr.mxu0 0.0
    %117 = vmatpush1.msra.mxu0 0.0
    %118 = vmatprep.subr.mxu0 0.0
    %119 = vmatpush1.msra.mxu0 0.0
    %120 = vmatprep.subr.mxu0 0.0
    %121 = vmatpush1.msra.mxu0 0.0
    %122 = vmatprep.subr.mxu0 0.0
    %123 = vmatpush1.msra.mxu0 0.0
    %124 = vmatprep.subr.mxu0 0.0
    %125 = vmatpush1.msra.mxu0 0.0
    %126 = vmatprep.subr.mxu0 0.0
    %127 = vmatpush1.msra.mxu0 0.0
    %128 = vmatprep.subr.mxu0 0.0
    %129 = vmatpush1.msra.mxu0 0.0
    %130 = vmatprep.subr.mxu0 0.0
    %131 = vmatpush1.msra.mxu0 0.0
    %132 = vmatprep.subr.mxu0 0.0
    %133 = vmatpush1.msra.mxu0 0.0
    %134 = vmatprep.subr.mxu0 0.0
    %135 = vmatpush1.msra.mxu0 0.0
    %136 = vmatprep.subr.mxu0 0.0
    %137 = vmatpush1.msra.mxu0 0.0
    %138 = vmatprep.subr.mxu0 0.0
    %139 = vmatpush1.msra.mxu0 0.0
    %140 = vmatprep.mubr.f32.mxu0 0.0
    %141 = vmatmul.mubr.f32.gmra.mrb[0].mxu0 %v54
    %v142 = vpop.f32.mrb[0].mxu0
    %v143 = vadd.f32 %v75, %v142
    %v144 = vpop.f32.mrb[0].mxu0
    %145 = vdwg.mxu0
    %v146 = vtanh.pop %v143
    %s147 = scalar_lea.vmem [#allocation5], 128
    %v148 = vld [vmem:[%s147] sm:$0xff]
    %v149 = vld [vmem:[%s147 + $0x8] sm:$0xff]
    %v150 = vld [vmem:[%s147 + $0x10] sm:$0xff]
    %v151 = vld [vmem:[%s147 + $0x18] sm:$0xff]
    %v152 = vld [vmem:[%s147 + $0x20] sm:$0xff]
    %v153 = vld [vmem:[%s147 + $0x28] sm:$0xff]
    %v154 = vld [vmem:[%s147 + $0x30] sm:$0xff]
    %v155 = vld [vmem:[%s147 + $0x38] sm:$0xff]
    %v156 = vld [vmem:[%s147 + $0x40] sm:$0xff]
    %v157 = vld [vmem:[%s147 + $0x48] sm:$0xff]
    %v158 = vld [vmem:[%s147 + $0x50] sm:$0xff]
    %v159 = vld [vmem:[%s147 + $0x58] sm:$0xff]
    %v160 = vld [vmem:[%s147 + $0x60] sm:$0xff]
    %v161 = vld [vmem:[%s147 + $0x68] sm:$0xff]
    %v162 = vld [vmem:[%s147 + $0x70] sm:$0xff]
    %v163 = vld [vmem:[%s147 + $0x78] sm:$0xff]
    %s164 = scalar_lea.vmem [#allocation7], 8
    %v165 = vld [vmem:[%s164] sm:$0x1]
    %v166 = vlaneseq
    %v167 = vshrl.u32 %v166, 7
    %v168 = vsub.s32 0, %v167
    %v169 = vrot.slane %v165, %v168
    %170 = vmatprep.subr.mxu0 0.0
    %171 = vmatpush1.msra.mxu0 %v148
    %172 = vmatprep.subr.mxu0 0.0
    %173 = vmatpush1.msra.mxu0 %v149
    %174 = vmatprep.subr.mxu0 0.0
    %175 = vmatpush1.msra.mxu0 %v150
    %176 = vmatprep.subr.mxu0 0.0
    %177 = vmatpush1.msra.mxu0 %v151
    %178 = vmatprep.subr.mxu0 0.0
    %179 = vmatpush1.msra.mxu0 %v152
    %180 = vmatprep.subr.mxu0 0.0
    %181 = vmatpush1.msra.mxu0 %v153
    %182 = vmatprep.subr.mxu0 0.0
    %183 = vmatpush1.msra.mxu0 %v154
    %184 = vmatprep.subr.mxu0 0.0
    %185 = vmatpush1.msra.mxu0 %v155
    %186 = vmatprep.subr.mxu0 0.0
    %187 = vmatpush1.msra.mxu0 %v156
    %188 = vmatprep.subr.mxu0 0.0
    %189 = vmatpush1.msra.mxu0 %v157
    %190 = vmatprep.subr.mxu0 0.0
    %191 = vmatpush1.msra.mxu0 %v158
    %192 = vmatprep.subr.mxu0 0.0
    %193 = vmatpush1.msra.mxu0 %v159
    %194 = vmatprep.subr.mxu0 0.0
    %195 = vmatpush1.msra.mxu0 %v160
    %196 = vmatprep.subr.mxu0 0.0
    %197 = vmatpush1.msra.mxu0 %v161
    %198 = vmatprep.subr.mxu0 0.0
    %199 = vmatpush1.msra.mxu0 %v162
    %200 = vmatprep.subr.mxu0 0.0
    %201 = vmatpush1.msra.mxu0 %v163
    %202 = vmatprep.subr.mxu0 0.0
    %203 = vmatpush1.msra.mxu0 0.0
    %204 = vmatprep.subr.mxu0 0.0
    %205 = vmatpush1.msra.mxu0 0.0
    %206 = vmatprep.subr.mxu0 0.0
    %207 = vmatpush1.msra.mxu0 0.0
    %208 = vmatprep.subr.mxu0 0.0
    %209 = vmatpush1.msra.mxu0 0.0
    %210 = vmatprep.subr.mxu0 0.0
    %211 = vmatpush1.msra.mxu0 0.0
    %212 = vmatprep.subr.mxu0 0.0
    %213 = vmatpush1.msra.mxu0 0.0
    %214 = vmatprep.subr.mxu0 0.0
    %215 = vmatpush1.msra.mxu0 0.0
    %216 = vmatprep.subr.mxu0 0.0
    %217 = vmatpush1.msra.mxu0 0.0
    %218 = vmatprep.subr.mxu0 0.0
    %219 = vmatpush1.msra.mxu0 0.0
    %220 = vmatprep.subr.mxu0 0.0
    %221 = vmatpush1.msra.mxu0 0.0
    %222 = vmatprep.subr.mxu0 0.0
    %223 = vmatpush1.msra.mxu0 0.0
    %224 = vmatprep.subr.mxu0 0.0
    %225 = vmatpush1.msra.mxu0 0.0
    %226 = vmatprep.subr.mxu0 0.0
    %227 = vmatpush1.msra.mxu0 0.0
    %228 = vmatprep.subr.mxu0 0.0
    %229 = vmatpush1.msra.mxu0 0.0
    %230 = vmatprep.subr.mxu0 0.0
    %231 = vmatpush1.msra.mxu0 0.0
    %232 = vmatprep.subr.mxu0 0.0
    %233 = vmatpush1.msra.mxu0 0.0
    %234 = vmatprep.mubr.f32.mxu0 0.0
    %235 = vmatmul.mubr.f32.gmra.mrb[0].mxu0 %v146
    %v236 = vpop.f32.mrb[0].mxu0
    %v237 = vadd.f32 %v169, %v236
    %v238 = vpop.f32.mrb[0].mxu0
    %239 = vdwg.mxu0
    %v240 = vtanh.pop %v237
    %s241 = scalar_lea.vmem [#allocation5], 256
    %v242 = vld [vmem:[%s241] sm:$0xff]
    %v243 = vld [vmem:[%s241 + $0x8] sm:$0xff]
    %v244 = vld [vmem:[%s241 + $0x10] sm:$0xff]
    %v245 = vld [vmem:[%s241 + $0x18] sm:$0xff]
    %v246 = vld [vmem:[%s241 + $0x20] sm:$0xff]
    %v247 = vld [vmem:[%s241 + $0x28] sm:$0xff]
    %v248 = vld [vmem:[%s241 + $0x30] sm:$0xff]
    %v249 = vld [vmem:[%s241 + $0x38] sm:$0xff]
    %v250 = vld [vmem:[%s241 + $0x40] sm:$0xff]
    %v251 = vld [vmem:[%s241 + $0x48] sm:$0xff]
    %v252 = vld [vmem:[%s241 + $0x50] sm:$0xff]
    %v253 = vld [vmem:[%s241 + $0x58] sm:$0xff]
    %v254 = vld [vmem:[%s241 + $0x60] sm:$0xff]
    %v255 = vld [vmem:[%s241 + $0x68] sm:$0xff]
    %v256 = vld [vmem:[%s241 + $0x70] sm:$0xff]
    %v257 = vld [vmem:[%s241 + $0x78] sm:$0xff]
    %s258 = scalar_lea.vmem [#allocation7], 16
    %v259 = vld [vmem:[%s258] sm:$0x1]
    %v260 = vlaneseq
    %v261 = vshrl.u32 %v260, 7
    %v262 = vsub.s32 0, %v261
    %v263 = vrot.slane %v259, %v262
    %264 = vmatprep.subr.mxu0 0.0
    %265 = vmatpush1.msra.mxu0 %v242
    %266 = vmatprep.subr.mxu0 0.0
    %267 = vmatpush1.msra.mxu0 %v243
    %268 = vmatprep.subr.mxu0 0.0
    %269 = vmatpush1.msra.mxu0 %v244
    %270 = vmatprep.subr.mxu0 0.0
    %271 = vmatpush1.msra.mxu0 %v245
    %272 = vmatprep.subr.mxu0 0.0
    %273 = vmatpush1.msra.mxu0 %v246
    %274 = vmatprep.subr.mxu0 0.0
    %275 = vmatpush1.msra.mxu0 %v247
    %276 = vmatprep.subr.mxu0 0.0
    %277 = vmatpush1.msra.mxu0 %v248
    %278 = vmatprep.subr.mxu0 0.0
    %279 = vmatpush1.msra.mxu0 %v249
    %280 = vmatprep.subr.mxu0 0.0
    %281 = vmatpush1.msra.mxu0 %v250
    %282 = vmatprep.subr.mxu0 0.0
    %283 = vmatpush1.msra.mxu0 %v251
    %284 = vmatprep.subr.mxu0 0.0
    %285 = vmatpush1.msra.mxu0 %v252
    %286 = vmatprep.subr.mxu0 0.0
    %287 = vmatpush1.msra.mxu0 %v253
    %288 = vmatprep.subr.mxu0 0.0
    %289 = vmatpush1.msra.mxu0 %v254
    %290 = vmatprep.subr.mxu0 0.0
    %291 = vmatpush1.msra.mxu0 %v255
    %292 = vmatprep.subr.mxu0 0.0
    %293 = vmatpush1.msra.mxu0 %v256
    %294 = vmatprep.subr.mxu0 0.0
    %295 = vmatpush1.msra.mxu0 %v257
    %296 = vmatprep.subr.mxu0 0.0
    %297 = vmatpush1.msra.mxu0 0.0
    %298 = vmatprep.subr.mxu0 0.0
    %299 = vmatpush1.msra.mxu0 0.0
    %300 = vmatprep.subr.mxu0 0.0
    %301 = vmatpush1.msra.mxu0 0.0
    %302 = vmatprep.subr.mxu0 0.0
    %303 = vmatpush1.msra.mxu0 0.0
    %304 = vmatprep.subr.mxu0 0.0
    %305 = vmatpush1.msra.mxu0 0.0
    %306 = vmatprep.subr.mxu0 0.0
    %307 = vmatpush1.msra.mxu0 0.0
    %308 = vmatprep.subr.mxu0 0.0
    %309 = vmatpush1.msra.mxu0 0.0
    %310 = vmatprep.subr.mxu0 0.0
    %311 = vmatpush1.msra.mxu0 0.0
    %312 = vmatprep.subr.mxu0 0.0
    %313 = vmatpush1.msra.mxu0 0.0
    %314 = vmatprep.subr.mxu0 0.0
    %315 = vmatpush1.msra.mxu0 0.0
    %316 = vmatprep.subr.mxu0 0.0
    %317 = vmatpush1.msra.mxu0 0.0
    %318 = vmatprep.subr.mxu0 0.0
    %319 = vmatpush1.msra.mxu0 0.0
    %320 = vmatprep.subr.mxu0 0.0
    %321 = vmatpush1.msra.mxu0 0.0
    %322 = vmatprep.subr.mxu0 0.0
    %323 = vmatpush1.msra.mxu0 0.0
    %324 = vmatprep.subr.mxu0 0.0
    %325 = vmatpush1.msra.mxu0 0.0
    %326 = vmatprep.subr.mxu0 0.0
    %327 = vmatpush1.msra.mxu0 0.0
    %328 = vmatprep.mubr.f32.mxu0 0.0
    %329 = vmatmul.mubr.f32.gmra.mrb[0].mxu0 %v240
    %v330 = vpop.f32.mrb[0].mxu0
    %v331 = vadd.f32 %v263, %v330
    %v332 = vpop.f32.mrb[0].mxu0
    %333 = vdwg.mxu0
    %334 = vst [vmem:[#allocation8] sm:$0xff] %v331
    // Predicated region
    $region26: #{tpu_custom_call.1} parent=1 // pred_check
      _
    $region27: #{tpu_custom_call.1} parent=1 // pred_check_branch
      %336 = sbr.rel (0) target = $region29
    $region28: #{tpu_custom_call.1} parent=1 // pred_region
      %s338 = ssub.s32 128, 128
      %339 = vsyncadd [#allocation4], %s338
      %s341 = sshll.u32 [#allocation8], 4
      %s342 = int_to_ptr.vmem [resolvable:$true] %s341
      %344 = dma.vmem_to_hbm [thread:$0]  %s342, 128, %s3, [#allocation4]
    $region29: #{tpu_custom_call.1} parent=1 // pred_fallthru
      _
    // Predicated region
    $region30: #{tpu_custom_call.1} parent=1 // pred_check
      _
    $region31: #{tpu_custom_call.1} parent=1 // pred_check_branch
      %346 = sbr.rel (0) target = $region33
    $region32: #{tpu_custom_call.1} parent=1 // pred_region
      %347 = dma.done [#allocation4], 128
    $region33: #{tpu_custom_call.1} parent=1 // pred_fallthru
      _
    %348 = vsyncpa [#allocation3], 1
    %349 = vsyncpa [#allocation6], 1
    %350 = vsyncpa [#allocation4], 1

</llo_original>
